<compile_context>
chip_gen: v5e
topology: v5e:2x2
jax: 0.10.0
libtpu: 0.0.40
codegen_flags: <defaults>
</compile_context>

<pallas_src>
import functools

import jax
import jax.numpy as jnp
from jax.experimental import pallas as pl
from jax.experimental.pallas import tpu as pltpu

_LANE = 128
_SUBLANE = 8


def _round_up(n: int, m: int) -> int:
    return ((n + m - 1) // m) * m


def _embedder_kernel(x_ref, w1_ref, w2_ref, out_ref):
    # x:  (Mp, Xa)   — last column is the constant-ones bias column
    # w1: (Xa, Hp)   — row Xa-1 holds b1; column Hp-1 is the bias-carrier channel
    # w2: (Hp, Zp)   — row Hp-1 holds b2
    # out:(Mp, Zp)
    h = jnp.dot(x_ref[...], w1_ref[...], preferred_element_type=jnp.float32)
    h = jnp.maximum(h, 0.0)  # ReLU on the VPU; bias-carrier column stays ReLU(1)=1
    y = jnp.dot(h, w2_ref[...], preferred_element_type=jnp.float32)
    out_ref[...] = y.astype(out_ref.dtype)


def init_params(key, x_dim, h_dim, z_dim):
    """Raw nn.Linear-equivalent params (weights stored pre-transposed: x @ W)."""
    ks = jax.random.split(key, 4)
    s = 0.1
    return {
        "w1": s * jax.random.normal(ks[0], (x_dim, h_dim), jnp.float32),
        "b1": s * jax.random.normal(ks[1], (1, h_dim), jnp.float32),
        "w2": s * jax.random.normal(ks[2], (h_dim, z_dim), jnp.float32),
        "b2": s * jax.random.normal(ks[3], (1, z_dim), jnp.float32),
    }


def fuse_params(params):
    """One-time prep: fold biases into zero-padded, lane-aligned weight matrices.

    Returns {"w1": (X+1, Hp), "w2": (Hp, Zp)} with Hp, Zp multiples of 128.
    """
    w1, b1, w2, b2 = params["w1"], params["b1"], params["w2"], params["b2"]
    X, H = w1.shape
    Z = w2.shape[1]
    Xa = X + 1                              # +1 ones column on x carries b1
    Hp = _round_up(H + 1, _LANE)            # +1 reserves the bias-carrier channel
    Zp = _round_up(max(Z, _LANE), _LANE)    # lane-dense output (unmasked vst)

    w1_aug = jnp.zeros((Xa, Hp), jnp.float32)
    w1_aug = w1_aug.at[:X, :H].set(w1)
    w1_aug = w1_aug.at[X, :H].set(b1.reshape(H))   # bias row * ones column = b1
    w1_aug = w1_aug.at[X, Hp - 1].set(1.0)         # bias carrier: h[:, Hp-1] == 1

    w2_aug = jnp.zeros((Hp, Zp), jnp.float32)
    w2_aug = w2_aug.at[:H, :Z].set(w2)
    w2_aug = w2_aug.at[Hp - 1, :Z].set(b2.reshape(Z))  # carrier row adds b2

    return {"w1": jnp.asarray(w1_aug), "w2": jnp.asarray(w2_aug)}


@functools.partial(jax.jit, static_argnames=("z_dim",))
def embedder_forward(x, fused, *, z_dim):
    """x: (..., x_dim) f32 -> (..., z_dim) = Linear(ReLU(Linear(x))) via one Pallas call."""
    w1_aug, w2_aug = fused["w1"], fused["w2"]
    Xa, Hp = w1_aug.shape
    Zp = w2_aug.shape[1]
    X = Xa - 1

    lead = x.shape[:-1]
    M = 1
    for d in lead:
        M *= int(d)

    # Per-call input prep: flatten leading dims, append the ones column, sublane-pad M.
    x2d = x.reshape(M, X)
    x_aug = jnp.concatenate([x2d, jnp.ones((M, 1), x2d.dtype)], axis=-1)
    Mp = _round_up(max(M, _SUBLANE), _SUBLANE)
    if Mp != M:
        x_aug = jnp.pad(x_aug, ((0, Mp - M), (0, 0)))

    cost = pl.CostEstimate(
        flops=2 * Mp * Xa * Hp + 2 * Mp * Hp * Zp,
        transcendentals=0,
        bytes_accessed=4 * (Mp * Xa + Xa * Hp + Hp * Zp + Mp * Zp),
    )

    out = pl.pallas_call(
        _embedder_kernel,
        out_shape=jax.ShapeDtypeStruct((Mp, Zp), jnp.float32),
        # No grid: one invocation, all operands (a few KiB) resident in VMEM.
        in_specs=[pl.BlockSpec(memory_space=pltpu.MemorySpace.VMEM) for _ in range(3)],
        out_specs=pl.BlockSpec(memory_space=pltpu.MemorySpace.VMEM),
        cost_estimate=cost,
    )(x_aug, w1_aug, w2_aug)

    return out[:M, :z_dim].reshape(*lead, z_dim)


def ref_forward(x, params):
    """Pure-JAX reference mirroring the PyTorch Embedder semantics."""
    h = jnp.maximum(x @ params["w1"] + params["b1"], 0.0)
    return h @ params["w2"] + params["b2"]


if __name__ == "__main__":
    SEQ, BATCH, X_DIM, H_DIM, Z_DIM = 8, 2, 16, 32, 8

    key = jax.random.PRNGKey(0)
    k_x, k_p = jax.random.split(key)
    x = jax.random.normal(k_x, (SEQ, BATCH, X_DIM), jnp.float32)
    params = init_params(k_p, X_DIM, H_DIM, Z_DIM)
    fused = fuse_params(params)          # one-time param prep (outside the hot path)

    out = jax.block_until_ready(embedder_forward(x, fused, z_dim=Z_DIM))
    ref = jax.block_until_ready(ref_forward(x, params))

    assert out.shape == (SEQ, BATCH, Z_DIM), out.shape
    assert jnp.allclose(out, ref, atol=2e-5, rtol=1e-5), (
        float(jnp.max(jnp.abs(out - ref))))

    print("KERNEL_OK")
</pallas_src>

<mosaic_0001>
module attributes {stable_mosaic.version = 11 : i64} {
  func.func @_embedder_kernel(%arg0: memref<16x17xf32, #tpu.memory_space<vmem>>, %arg1: memref<17x128xf32, #tpu.memory_space<vmem>>, %arg2: memref<128x128xf32, #tpu.memory_space<vmem>>, %arg3: memref<16x128xf32, #tpu.memory_space<vmem>>) attributes {dimension_semantics = [], scalar_prefetch = 0 : i64, scratch_operands = 0 : i64, tpu.core_type = #tpu.core_type<tc>} {
    %c0 = arith.constant 0 : index
    %c0_0 = arith.constant 0 : index
    %0 = vector.load %arg0[%c0, %c0_0] : memref<16x17xf32, #tpu.memory_space<vmem>>, vector<16x17xf32>
    %c0_1 = arith.constant 0 : index
    %c0_2 = arith.constant 0 : index
    %1 = vector.load %arg1[%c0_1, %c0_2] : memref<17x128xf32, #tpu.memory_space<vmem>>, vector<17x128xf32>
    %cst = arith.constant dense<0.000000e+00> : vector<16x128xf32>
    %2 = tpu.matmul %0, %1, %cst {dimension_numbers = #tpu.dot_dimension_numbers<[1], [0], [0], [1], [0, 0, 1, 1], [], []>} : vector<16x17xf32>, vector<17x128xf32>, vector<16x128xf32> -> vector<16x128xf32>
    %cst_3 = arith.constant 0.000000e+00 : f32
    %3 = vector.broadcast %cst_3 : f32 to vector<16x128xf32>
    %4 = arith.maximumf %2, %3 : vector<16x128xf32>
    %c0_4 = arith.constant 0 : index
    %c0_5 = arith.constant 0 : index
    %5 = vector.load %arg2[%c0_4, %c0_5] : memref<128x128xf32, #tpu.memory_space<vmem>>, vector<128x128xf32>
    %cst_6 = arith.constant dense<0.000000e+00> : vector<16x128xf32>
    %6 = tpu.matmul %4, %5, %cst_6 {dimension_numbers = #tpu.dot_dimension_numbers<[1], [0], [0], [1], [0, 0, 1, 1], [], []>} : vector<16x128xf32>, vector<128x128xf32>, vector<16x128xf32> -> vector<16x128xf32>
    %c0_7 = arith.constant 0 : index
    %c0_8 = arith.constant 0 : index
    %7 = vector.load %arg3[%c0_7, %c0_8] : memref<16x128xf32, #tpu.memory_space<vmem>>, vector<16x128xf32>
    tpu.vector_store %arg3[%c0_7, %c0_8], %6 {strides = array<i32>} : memref<16x128xf32, #tpu.memory_space<vmem>>, vector<16x128xf32>,
    return
  }
}

</mosaic_0001>

<llo_original>
// kernel: embedder_forward.1
$region0: #{embedder_forward.1}
  #allocation0 [shape = 'u32[]', space=smem, size = 0x4, offset = 0x4, fixed_abs, tag = 'smem constant byte address 0x4 - core index']
  #allocation1 [shape = 'u32[72,128]{1,0:T(1,128)}', space=vmem, size = 0x9000, scoped, tag = 'internal scratch']
  %s0 = inlined_call_operand.vmem [shape: f32[16,17], index: 0, kind: input, shape index: {}]
  %s1 = inlined_call_operand.vmem [shape: f32[17,128], index: 1, kind: input, shape index: {}]
  %s2 = inlined_call_operand.hbm [shape: f32[128,128], index: 2, kind: input, shape index: {}]
  %s3 = inlined_call_operand.hbm [shape: f32[16,128], index: 3, kind: output, shape index: {}]
  %s4 = sld [smem:[#allocation0]]
  $region26: #{embedder_forward.1} parent=0
    _
  %s6 = ssub.s32 1, %s4
  %s7 = scalar_select 0, %s6, %s4
  $region1: #{embedder_forward.1} parent=0
    #allocation2 [shape = 'u8[65536]{0}', space=vmem, size = 0x10000, scoped, tag = 'input window, operand 2, single buffered']
    #allocation3 [shape = 's32[1]{0}', space=sflag, size = 0x4, scoped, tag = 'scoped memory for embedder_forward.1']
    #allocation4 [shape = 's32[1]{0}', space=sflag, size = 0x4, scoped, tag = 'scoped memory for embedder_forward.1']
    #allocation5 [shape = 'u8[8192]{0}', space=vmem, size = 0x2000, scoped, tag = 'output window, operand 0, single buffered']
    %8 = vsyncpa [#allocation3], 0
    %9 = vsyncpa [#allocation4], 0
    // Predicated region
    $region2: #{embedder_forward.1} parent=1 // pred_check
      _
    $region3: #{embedder_forward.1} parent=1 // pred_check_branch
      %11 = sbr.rel (0) target = $region5
    $region4: #{embedder_forward.1} parent=1 // pred_region
      _
    $region5: #{embedder_forward.1} parent=1 // pred_fallthru
      _
    // Predicated region
    $region6: #{embedder_forward.1} parent=1 // pred_check
      _
    $region7: #{embedder_forward.1} parent=1 // pred_check_branch
      %13 = sbr.rel (0) target = $region9
    $region8: #{embedder_forward.1} parent=1 // pred_region
      _
    $region9: #{embedder_forward.1} parent=1 // pred_fallthru
      _
    // Predicated region
    $region10: #{embedder_forward.1} parent=1 // pred_check
      _
    $region11: #{embedder_forward.1} parent=1 // pred_check_branch
      %15 = sbr.rel (0) target = $region13
    $region12: #{embedder_forward.1} parent=1 // pred_region
      %17 = vsyncadd [#allocation3], 0
      %s18 = sshll.u32 %s2, 4
      %s19 = int_to_ptr.hbm [resolvable:$true] %s18
      %s20 = sshll.u32 [#allocation2], 4
      %s21 = int_to_ptr.vmem [resolvable:$true] %s20
      %26 = dma.hbm_to_vmem [thread:$0]  %s19, 2048, %s21, [#allocation3], 128, 128, 8
    $region13: #{embedder_forward.1} parent=1 // pred_fallthru
      _
    // Predicated region
    $region14: #{embedder_forward.1} parent=1 // pred_check
      _
    $region15: #{embedder_forward.1} parent=1 // pred_check_branch
      %28 = sbr.rel (0) target = $region17
    $region16: #{embedder_forward.1} parent=1 // pred_region
      %30 = dma.done [#allocation3], 2048
    $region17: #{embedder_forward.1} parent=1 // pred_fallthru
      _
    %v31 = vld [vmem:[%s0] sm:$0xff]
    %v32 = vld [vmem:[%s0 + $0x8] sm:$0xff]
    %v33 = vld [vmem:[%s1] sm:$0xff]
    %v34 = vld [vmem:[%s1 + $0x8] sm:$0xff]
    %v35 = vld [vmem:[%s1 + $0x10] sm:$0x1]
    %vm36 = vcmask 138240
    %v38 = vsel %vm36, %v31, 0
    %v41 = vsel %vm36, %v32, 0
    %vm43 = vcmask 1040384
    %v45 = vsel %vm43, %v35, 0
    %47 = vmatpush.msra.mxu0 0.0
    %48 = vmatpush.msra.mxu0 0.0
    %49 = vmatpush.msra.mxu0 0.0
    %50 = vmatpush.msra.mxu0 0.0
    %51 = vmatpush.msra.mxu0 0.0
    %52 = vmatpush.msra.mxu0 0.0
    %53 = vmatpush.msra.mxu0 0.0
    %54 = vmatpush.msra.mxu0 0.0
    %55 = vmatpush.msra.mxu0 0.0
    %56 = vmatpush.msra.mxu0 0.0
    %57 = vmatpush.msra.mxu0 0.0
    %58 = vmatpush.msra.mxu0 0.0
    %59 = vmatpush.msra.mxu0 0.0
    %60 = vmatpush.msra.mxu0 %v45
    %61 = vmatpush.msra.mxu0 %v34
    %62 = vmatpush.msra.mxu0 %v33
    %63 = vmatmul.f32.gmra.mxu0 %v38
    %v64 = vpop.f32.mrf.mxu0
    %v65 = vadd.f32 0.0, %v64
    %66 = vmatmul.f32.gmra.mxu0 %v41
    %v67 = vpop.f32.mrf.mxu0
    %v68 = vadd.f32 0.0, %v67
    %69 = vdwg.mxu0
    %v70 = vmax.f32 %v65, 0.0
    %v71 = vmax.f32 %v68, 0.0
    %v72 = vld [vmem:[#allocation2] sm:$0xff]
    %v73 = vld [vmem:[#allocation2 + $0x8] sm:$0xff]
    %v74 = vld [vmem:[#allocation2 + $0x10] sm:$0xff]
    %v75 = vld [vmem:[#allocation2 + $0x18] sm:$0xff]
    %v76 = vld [vmem:[#allocation2 + $0x20] sm:$0xff]
    %v77 = vld [vmem:[#allocation2 + $0x28] sm:$0xff]
    %v78 = vld [vmem:[#allocation2 + $0x30] sm:$0xff]
    %v79 = vld [vmem:[#allocation2 + $0x38] sm:$0xff]
    %v80 = vld [vmem:[#allocation2 + $0x40] sm:$0xff]
    %v81 = vld [vmem:[#allocation2 + $0x48] sm:$0xff]
    %v82 = vld [vmem:[#allocation2 + $0x50] sm:$0xff]
    %v83 = vld [vmem:[#allocation2 + $0x58] sm:$0xff]
    %v84 = vld [vmem:[#allocation2 + $0x60] sm:$0xff]
    %v85 = vld [vmem:[#allocation2 + $0x68] sm:$0xff]
    %v86 = vld [vmem:[#allocation2 + $0x70] sm:$0xff]
    %v87 = vld [vmem:[#allocation2 + $0x78] sm:$0xff]
    %88 = vmatpush.msra.mxu0 %v87
    %89 = vmatpush.msra.mxu0 %v86
    %90 = vmatpush.msra.mxu0 %v85
    %91 = vmatpush.msra.mxu0 %v84
    %92 = vmatpush.msra.mxu0 %v83
    %93 = vmatpush.msra.mxu0 %v82
    %94 = vmatpush.msra.mxu0 %v81
    %95 = vmatpush.msra.mxu0 %v80
    %96 = vmatpush.msra.mxu0 %v79
    %97 = vmatpush.msra.mxu0 %v78
    %98 = vmatpush.msra.mxu0 %v77
    %99 = vmatpush.msra.mxu0 %v76
    %100 = vmatpush.msra.mxu0 %v75
    %101 = vmatpush.msra.mxu0 %v74
    %102 = vmatpush.msra.mxu0 %v73
    %103 = vmatpush.msra.mxu0 %v72
    %104 = vmatmul.f32.gmra.mxu0 %v70
    %v105 = vpop.f32.mrf.mxu0
    %v106 = vadd.f32 0.0, %v105
    %107 = vmatmul.f32.gmra.mxu0 %v71
    %v108 = vpop.f32.mrf.mxu0
    %v109 = vadd.f32 0.0, %v108
    %110 = vdwg.mxu0
    %111 = vst [vmem:[#allocation5] sm:$0xff] %v106
    %112 = vst [vmem:[#allocation5 + $0x8] sm:$0xff] %v109
    // Predicated region
    $region18: #{embedder_forward.1} parent=1 // pred_check
      _
    $region19: #{embedder_forward.1} parent=1 // pred_check_branch
      %114 = sbr.rel (0) target = $region21
    $region20: #{embedder_forward.1} parent=1 // pred_region
      %116 = vsyncadd [#allocation4], 0
      %s117 = sshll.u32 [#allocation5], 4
      %s118 = int_to_ptr.vmem [resolvable:$true] %s117
      %s119 = sshll.u32 %s3, 4
      %s120 = int_to_ptr.hbm [resolvable:$true] %s119
      %125 = dma.vmem_to_hbm [thread:$0]  %s118, 256, %s120, [#allocation4], 128, 128, 8
    $region21: #{embedder_forward.1} parent=1 // pred_fallthru
      _
    // Predicated region
    $region22: #{embedder_forward.1} parent=1 // pred_check
      _
    $region23: #{embedder_forward.1} parent=1 // pred_check_branch
      %127 = sbr.rel (0) target = $region25
    $region24: #{embedder_forward.1} parent=1 // pred_region
      %129 = dma.done [#allocation4], 256
    $region25: #{embedder_forward.1} parent=1 // pred_fallthru
      _
    %130 = vsyncpa [#allocation3], 1
    %131 = vsyncpa [#allocation4], 1

</llo_original>
